<compile_context>
chip_gen: v7x
topology: tpu7x:2x2x1
jax: 0.10.0
libtpu: 0.0.40
codegen_flags: <defaults>
</compile_context>

<pallas_src>
import numpy as np
import jax
import jax.numpy as jnp
from jax.experimental import pallas as pl
from jax.experimental.pallas import tpu as pltpu

C_LIGHT = 299792458.0
PI = float(np.pi)
TWO_PI = 2.0 * PI
INV_TWO_PI = 1.0 / TWO_PI


def freq_to_wavelength(freq: float) -> float:
    return C_LIGHT / freq


def _round_up(x: int, m: int) -> int:
    return (x + m - 1) // m * m


class Beamformer:
    """Minimal deterministic stand-in: pairwise baseline distances & angles."""

    def __init__(self, freq, ants_loc, topology):
        ants_loc = np.asarray(ants_loc, dtype=np.float64)
        d, a = [], []
        for i, j in topology:
            dv = ants_loc[j] - ants_loc[i]
            d.append(float(np.hypot(dv[0], dv[1])))
            a.append(float(np.arctan2(dv[1], dv[0])))
        self.dists = np.asarray(d)
        self.angles = np.asarray(a)


# ---------------------------------------------------------------------------
# In-kernel math helpers (only ops with guaranteed Mosaic lowerings:
# mul/add/abs/sqrt/floor/where/compare — no acos/cos primitives needed).
# ---------------------------------------------------------------------------
def _asin_core(z):
    # Cephes-style float32 asin on z in [0, 0.5]: z + z*w*P(w), w = z*z (~1e-7 abs err)
    w = z * z
    p = jnp.float32(4.2163199048e-2)
    p = p * w + jnp.float32(2.4181311049e-2)
    p = p * w + jnp.float32(4.5470025998e-2)
    p = p * w + jnp.float32(7.4953002686e-2)
    p = p * w + jnp.float32(1.6666752422e-1)
    return z + z * w * p


def _acos(x):
    # float32 arccos; returns NaN for |x| > 1 (matches torch.acos semantics).
    a = jnp.abs(x)
    asin_a = _asin_core(a)
    small = PI / 2.0 - jnp.where(x >= 0, asin_a, -asin_a)   # |x| <= 0.5
    z = (1.0 - a) * 0.5                                     # negative (-> NaN) if |x| > 1
    t = 2.0 * _asin_core(jnp.sqrt(z))
    big = jnp.where(x > 0, t, PI - t)                       # |x| > 0.5
    return jnp.where(a <= 0.5, small, big)


# ---------------------------------------------------------------------------
# Pallas kernel: elementwise hot path + per-block NaN indicator.
# ---------------------------------------------------------------------------
def _interf_kernel(phases_ref, inv_scale_ref, angles_ref, doa_ref, flag_ref):
    ph = phases_ref[...]                                    # (TB, L) f32, lane-dense
    # acos(cos(x)) == |((x + pi) mod 2*pi) - pi|   (principal wrap to [0, pi])
    t = ph + PI
    wrapped = jnp.abs(t - TWO_PI * jnp.floor(t * INV_TWO_PI) - PI)

    ratio = wrapped * inv_scale_ref[...]                    # (1, L) broadcast over sublanes
    doa = _acos(ratio) - angles_ref[...]
    doa_ref[...] = doa

    # Per-block NaN indicator written to a distinct (8,128) block -> no carried
    # state, so the grid axis can be "parallel" (v7x 2-TC sharding safe).
    nan_max = jnp.max(jnp.where(jnp.isnan(doa), jnp.float32(1.0), jnp.float32(0.0)))
    flag_ref[...] = jnp.zeros(flag_ref.shape, jnp.int32) + (nan_max > 0.0).astype(jnp.int32)


@jax.jit
def _forward_impl(phases, inv_scale_t, angles_t):
    B, P = phases.shape
    L = inv_scale_t.shape[1]                                # lcm(P, 128): multiple of both
    N = B * P

    rows = -(-N // L)                                       # cdiv
    # Block rows: multiple of 8, capped so one block stays <= ~0.75 MiB
    # (double-buffered in+out ~ 3 MiB VMEM: safe on v7x's 64 MiB / 32 MiB scoped default).
    max_rows = max(8, (768 * 1024 // (L * 4)) // 8 * 8)
    tb = min(max_rows, _round_up(rows, 8))
    rows_pad = _round_up(rows, tb)
    num_blocks = rows_pad // tb

    flat = phases.astype(jnp.float32).reshape(-1)           # row-major reshape: free
    total = rows_pad * L
    if total != N:                                          # zero padding never produces NaN
        flat = jnp.concatenate([flat, jnp.zeros((total - N,), jnp.float32)])
    x = flat.reshape(rows_pad, L)

    doa_packed, flags = pl.pallas_call(
        _interf_kernel,
        grid=(num_blocks,),
        in_specs=[
            pl.BlockSpec((tb, L), lambda i: (i, 0)),        # phases tile (lane-dense)
            pl.BlockSpec((1, L), lambda i: (0, 0)),         # inv_scale (resident)
            pl.BlockSpec((1, L), lambda i: (0, 0)),         # angles (resident)
        ],
        out_specs=(
            pl.BlockSpec((tb, L), lambda i: (i, 0)),        # doa tile
            pl.BlockSpec((8, 128), lambda i: (i, 0)),       # per-block NaN flag
        ),
        out_shape=(
            jax.ShapeDtypeStruct((rows_pad, L), jnp.float32),
            jax.ShapeDtypeStruct((num_blocks * 8, 128), jnp.int32),
        ),
        compiler_params=pltpu.CompilerParams(dimension_semantics=("parallel",)),
    )(x, inv_scale_t, angles_t)

    doa = doa_packed.reshape(-1)[:N].reshape(B, P)
    nan_any = jnp.any(flags != 0)                           # tiny XLA reduce
    return doa, nan_any


class InterferometryPredictor:
    def __init__(self, freq, ants_loc, topology):
        self.doa_param = jnp.ones((1,), jnp.float32)        # nn.Parameter(torch.ones(1)); unused in forward
        self.wavelength = freq_to_wavelength(freq)
        bf = Beamformer(freq, ants_loc, topology)
        self.dists = jnp.asarray(bf.dists, jnp.float32).reshape(1, -1)
        self.angles = jnp.asarray(bf.angles, jnp.float32).reshape(1, -1)
        self.normalizer = float(
            np.max(2.0 * np.pi * bf.dists * np.cos(np.pi + bf.angles) / self.wavelength)
        )                                                   # unused in forward

        # Host-side constant folding + lane-dense tiling of per-pair constants.
        P = int(bf.dists.shape[0])
        L = int(np.lcm(P, 128))                             # packing width (multiple of P and 128)
        reps = L // P
        inv_scale = self.wavelength / (2.0 * np.pi * bf.dists)   # lambda / (2*pi*d), f64 on host
        self.inv_scale_tiled = jnp.asarray(np.tile(inv_scale, reps), jnp.float32).reshape(1, L)
        self.angles_tiled = jnp.asarray(np.tile(bf.angles, reps), jnp.float32).reshape(1, L)

    def forward_lazy(self, phases):
        """Returns (doa, nan_any) as device values, no host sync (preferred for pipelines)."""
        return _forward_impl(phases, self.inv_scale_tiled, self.angles_tiled)

    def forward(self, phases):
        doa, nan_any = self.forward_lazy(phases)
        # Mirrors `if torch.any(torch.isnan(doa)): return` — the Python-level None
        # return unavoidably needs one host branch on a single bool.
        if bool(jax.device_get(nan_any)):
            return None
        return doa

    __call__ = forward


if __name__ == "__main__":
    freq = 2.4e9
    spacing = 0.07  # > wavelength/2 ~ 0.0625 m  =>  acos argument stays inside [-1, 1]
    ants_loc = [(0.0, 0.0), (spacing, 0.0), (0.0, spacing), (spacing, spacing)]
    topology = [(0, 1), (0, 2), (0, 3), (1, 2), (1, 3), (2, 3)]  # 6 baselines

    model = InterferometryPredictor(freq, ants_loc, topology)

    B, P = 16, len(topology)
    key = jax.random.PRNGKey(0)
    phases = jax.random.uniform(key, (B, P), jnp.float32, minval=-4.0 * PI, maxval=4.0 * PI)

    doa = model.forward(phases)
    assert doa is not None, "unexpected NaN path"
    doa = jax.block_until_ready(doa)

    # sanity check against a plain-JAX transcription of the torch forward
    wrapped_ref = jnp.arccos(jnp.cos(phases))
    ref = jnp.arccos(wrapped_ref * model.wavelength / (2.0 * jnp.pi * model.dists)) - model.angles
    assert doa.shape == (B, P) and doa.dtype == jnp.float32
    assert jnp.allclose(doa, ref, atol=5e-3), float(jnp.max(jnp.abs(doa - ref)))

    print("KERNEL_OK")
</pallas_src>

<mosaic_0001>
module attributes {stable_mosaic.version = 11 : i64} {
  func.func @_interf_kernel(%arg0: i32, %arg1: memref<8x384xf32, #tpu.memory_space<vmem>>, %arg2: memref<1x384xf32, #tpu.memory_space<vmem>>, %arg3: memref<1x384xf32, #tpu.memory_space<vmem>>, %arg4: memref<8x384xf32, #tpu.memory_space<vmem>>, %arg5: memref<8x128xi32, #tpu.memory_space<vmem>>) attributes {dimension_semantics = [#tpu.dimension_semantics<parallel>], iteration_bounds = array<i64: 1>, scalar_prefetch = 0 : i64, scratch_operands = 0 : i64, tpu.core_type = #tpu.core_type<tc>, window_params = [{transform_indices = @transform_0, window_bounds = array<i64: 8, 384>}, {pipeline_mode = #tpu.pipeline_mode<synchronous>, transform_indices = @transform_1, window_bounds = array<i64: 1, 384>}, {pipeline_mode = #tpu.pipeline_mode<synchronous>, transform_indices = @transform_2, window_bounds = array<i64: 1, 384>}, {transform_indices = @transform_3, window_bounds = array<i64: 8, 384>}, {transform_indices = @transform_4, window_bounds = array<i64: 8, 128>}]} {
    %c0 = arith.constant 0 : index
    %c0_0 = arith.constant 0 : index
    %0 = vector.load %arg1[%c0, %c0_0] : memref<8x384xf32, #tpu.memory_space<vmem>>, vector<8x384xf32>
    %cst = arith.constant 3.14159274 : f32
    %1 = vector.broadcast %cst : f32 to vector<8x384xf32>
    %2 = arith.addf %0, %1 : vector<8x384xf32>
    %cst_1 = arith.constant 0.159154937 : f32
    %3 = vector.broadcast %cst_1 : f32 to vector<8x384xf32>
    %4 = arith.mulf %2, %3 : vector<8x384xf32>
    %5 = math.floor %4 : vector<8x384xf32>
    %cst_2 = arith.constant 6.28318548 : f32
    %6 = vector.broadcast %cst_2 : f32 to vector<8x384xf32>
    %7 = arith.mulf %6, %5 : vector<8x384xf32>
    %8 = arith.subf %2, %7 : vector<8x384xf32>
    %cst_3 = arith.constant 3.14159274 : f32
    %9 = vector.broadcast %cst_3 : f32 to vector<8x384xf32>
    %10 = arith.subf %8, %9 : vector<8x384xf32>
    %11 = math.absf %10 : vector<8x384xf32>
    %c0_4 = arith.constant 0 : index
    %c0_5 = arith.constant 0 : index
    %12 = vector.load %arg2[%c0_4, %c0_5] : memref<1x384xf32, #tpu.memory_space<vmem>>, vector<1x384xf32>
    %13 = vector.broadcast %12 : vector<1x384xf32> to vector<8x384xf32>
    %14 = arith.mulf %11, %13 : vector<8x384xf32>
    %15 = math.absf %14 : vector<8x384xf32>
    %16 = arith.mulf %15, %15 : vector<8x384xf32>
    %cst_6 = arith.constant 4.216320e-02 : f32
    %17 = vector.broadcast %cst_6 : f32 to vector<8x384xf32>
    %18 = arith.mulf %17, %16 : vector<8x384xf32>
    %cst_7 = arith.constant 0.024181312 : f32
    %19 = vector.broadcast %cst_7 : f32 to vector<8x384xf32>
    %20 = arith.addf %18, %19 : vector<8x384xf32>
    %21 = arith.mulf %20, %16 : vector<8x384xf32>
    %cst_8 = arith.constant 0.0454700254 : f32
    %22 = vector.broadcast %cst_8 : f32 to vector<8x384xf32>
    %23 = arith.addf %21, %22 : vector<8x384xf32>
    %24 = arith.mulf %23, %16 : vector<8x384xf32>
    %cst_9 = arith.constant 0.0749530047 : f32
    %25 = vector.broadcast %cst_9 : f32 to vector<8x384xf32>
    %26 = arith.addf %24, %25 : vector<8x384xf32>
    %27 = arith.mulf %26, %16 : vector<8x384xf32>
    %cst_10 = arith.constant 0.166667521 : f32
    %28 = vector.broadcast %cst_10 : f32 to vector<8x384xf32>
    %29 = arith.addf %27, %28 : vector<8x384xf32>
    %30 = arith.mulf %15, %16 : vector<8x384xf32>
    %31 = arith.mulf %30, %29 : vector<8x384xf32>
    %32 = arith.addf %15, %31 : vector<8x384xf32>
    %cst_11 = arith.constant 0.000000e+00 : f32
    %33 = vector.broadcast %cst_11 : f32 to vector<8x384xf32>
    %34 = arith.cmpf oge, %14, %33 : vector<8x384xf32>
    %cst_12 = arith.constant 0.000000e+00 : f32
    %35 = vector.broadcast %cst_12 : f32 to vector<8x384xf32>
    %36 = arith.subf %35, %32 : vector<8x384xf32>
    %37 = arith.select %34, %32, %36 : vector<8x384xi1>, vector<8x384xf32>
    %cst_13 = arith.constant 1.57079637 : f32
    %38 = vector.broadcast %cst_13 : f32 to vector<8x384xf32>
    %39 = arith.subf %38, %37 : vector<8x384xf32>
    %cst_14 = arith.constant 1.000000e+00 : f32
    %40 = vector.broadcast %cst_14 : f32 to vector<8x384xf32>
    %41 = arith.subf %40, %15 : vector<8x384xf32>
    %cst_15 = arith.constant 5.000000e-01 : f32
    %42 = vector.broadcast %cst_15 : f32 to vector<8x384xf32>
    %43 = arith.mulf %41, %42 : vector<8x384xf32>
    %44 = math.sqrt %43 : vector<8x384xf32>
    %45 = arith.mulf %44, %44 : vector<8x384xf32>
    %cst_16 = arith.constant 4.216320e-02 : f32
    %46 = vector.broadcast %cst_16 : f32 to vector<8x384xf32>
    %47 = arith.mulf %46, %45 : vector<8x384xf32>
    %cst_17 = arith.constant 0.024181312 : f32
    %48 = vector.broadcast %cst_17 : f32 to vector<8x384xf32>
    %49 = arith.addf %47, %48 : vector<8x384xf32>
    %50 = arith.mulf %49, %45 : vector<8x384xf32>
    %cst_18 = arith.constant 0.0454700254 : f32
    %51 = vector.broadcast %cst_18 : f32 to vector<8x384xf32>
    %52 = arith.addf %50, %51 : vector<8x384xf32>
    %53 = arith.mulf %52, %45 : vector<8x384xf32>
    %cst_19 = arith.constant 0.0749530047 : f32
    %54 = vector.broadcast %cst_19 : f32 to vector<8x384xf32>
    %55 = arith.addf %53, %54 : vector<8x384xf32>
    %56 = arith.mulf %55, %45 : vector<8x384xf32>
    %cst_20 = arith.constant 0.166667521 : f32
    %57 = vector.broadcast %cst_20 : f32 to vector<8x384xf32>
    %58 = arith.addf %56, %57 : vector<8x384xf32>
    %59 = arith.mulf %44, %45 : vector<8x384xf32>
    %60 = arith.mulf %59, %58 : vector<8x384xf32>
    %61 = arith.addf %44, %60 : vector<8x384xf32>
    %cst_21 = arith.constant 2.000000e+00 : f32
    %62 = vector.broadcast %cst_21 : f32 to vector<8x384xf32>
    %63 = arith.mulf %62, %61 : vector<8x384xf32>
    %cst_22 = arith.constant 0.000000e+00 : f32
    %64 = vector.broadcast %cst_22 : f32 to vector<8x384xf32>
    %65 = arith.cmpf ogt, %14, %64 : vector<8x384xf32>
    %cst_23 = arith.constant 3.14159274 : f32
    %66 = vector.broadcast %cst_23 : f32 to vector<8x384xf32>
    %67 = arith.subf %66, %63 : vector<8x384xf32>
    %68 = arith.select %65, %63, %67 : vector<8x384xi1>, vector<8x384xf32>
    %cst_24 = arith.constant 5.000000e-01 : f32
    %69 = vector.broadcast %cst_24 : f32 to vector<8x384xf32>
    %70 = arith.cmpf ole, %15, %69 : vector<8x384xf32>
    %71 = arith.select %70, %39, %68 : vector<8x384xi1>, vector<8x384xf32>
    %c0_25 = arith.constant 0 : index
    %c0_26 = arith.constant 0 : index
    %72 = vector.load %arg3[%c0_25, %c0_26] : memref<1x384xf32, #tpu.memory_space<vmem>>, vector<1x384xf32>
    %73 = vector.broadcast %72 : vector<1x384xf32> to vector<8x384xf32>
    %74 = arith.subf %71, %73 : vector<8x384xf32>
    %c0_27 = arith.constant 0 : index
    %c0_28 = arith.constant 0 : index
    %75 = vector.load %arg4[%c0_27, %c0_28] : memref<8x384xf32, #tpu.memory_space<vmem>>, vector<8x384xf32>
    tpu.vector_store %arg4[%c0_27, %c0_28], %74 {strides = array<i32>} : memref<8x384xf32, #tpu.memory_space<vmem>>, vector<8x384xf32>,
    %76 = arith.cmpf one, %74, %74 : vector<8x384xf32>
    %cst_29 = arith.constant 1.000000e+00 : f32
    %cst_30 = arith.constant 0.000000e+00 : f32
    %77 = vector.broadcast %cst_29 : f32 to vector<8x384xf32>
    %78 = vector.broadcast %cst_30 : f32 to vector<8x384xf32>
    %79 = arith.select %76, %77, %78 : vector<8x384xi1>, vector<8x384xf32>
    %80 = vector.shape_cast %79 : vector<8x384xf32> to vector<1x8x384xf32>
    %cst_31 = arith.constant dense<0xFF800000> : vector<1xf32>
    %81 = vector.multi_reduction <maximumf>, %80, %cst_31 [1, 2] : vector<1x8x384xf32> to vector<1xf32>
    %82 = vector.shape_cast %81 : vector<1xf32> to vector<1x1x1xf32>
    %83 = vector.extract %82[0, 0, 0] : f32 from vector<1x1x1xf32>
    %c0_i32 = arith.constant 0 : i32
    %84 = vector.broadcast %c0_i32 : i32 to vector<8x128xi32>
    %cst_32 = arith.constant 0.000000e+00 : f32
    %85 = arith.cmpf ogt, %83, %cst_32 : f32
    %86 = arith.extui %85 : i1 to i32
    %87 = vector.broadcast %86 : i32 to vector<8x128xi32>
    %88 = arith.addi %84, %87 : vector<8x128xi32>
    %c0_33 = arith.constant 0 : index
    %c0_34 = arith.constant 0 : index
    %89 = vector.load %arg5[%c0_33, %c0_34] : memref<8x128xi32, #tpu.memory_space<vmem>>, vector<8x128xi32>
    tpu.vector_store %arg5[%c0_33, %c0_34], %88 {strides = array<i32>} : memref<8x128xi32, #tpu.memory_space<vmem>>, vector<8x128xi32>,
    return
  }
  func.func @transform_0(%arg0: i32) -> (i32, i32) {
    %c0_i32 = arith.constant 0 : i32
    %c0_i32_0 = arith.constant 0 : i32
    return %arg0, %c0_i32 : i32, i32
  }
  func.func @transform_1(%arg0: i32) -> (i32, i32) {
    %c0_i32 = arith.constant 0 : i32
    %c0_i32_0 = arith.constant 0 : i32
    %c0_i32_1 = arith.constant 0 : i32
    return %c0_i32, %c0_i32_0 : i32, i32
  }
  func.func @transform_2(%arg0: i32) -> (i32, i32) {
    %c0_i32 = arith.constant 0 : i32
    %c0_i32_0 = arith.constant 0 : i32
    %c0_i32_1 = arith.constant 0 : i32
    return %c0_i32, %c0_i32_0 : i32, i32
  }
  func.func @transform_3(%arg0: i32) -> (i32, i32) {
    %c0_i32 = arith.constant 0 : i32
    %c0_i32_0 = arith.constant 0 : i32
    return %arg0, %c0_i32 : i32, i32
  }
  func.func @transform_4(%arg0: i32) -> (i32, i32) {
    %c0_i32 = arith.constant 0 : i32
    %c0_i32_0 = arith.constant 0 : i32
    return %arg0, %c0_i32 : i32, i32
  }
}

</mosaic_0001>

<llo_original>
// kernel: _forward_impl.1
$region0: #{_forward_impl.1}
  #allocation0 [shape = 'u32[]', space=smem, size = 0x4, offset = 0x4, fixed_abs, tag = 'smem constant byte address 0x4 - core index']
  #allocation1 [shape = 'u32[144,128]{1,0:T(1,128)}', space=vmem, size = 0x12000, scoped, tag = 'internal scratch']
  %s0 = inlined_call_operand.vmem [shape: f32[8,384], index: 0, kind: input, shape index: {}]
  %s1 = inlined_call_operand.vmem [shape: f32[1,384], index: 1, kind: input, shape index: {}]
  %s2 = inlined_call_operand.vmem [shape: f32[1,384], index: 2, kind: input, shape index: {}]
  %s3 = inlined_call_operand.vmem [shape: f32[8,384], index: 3, kind: output, shape index: {0}]
  %s4 = inlined_call_operand.vmem [shape: s32[8,128], index: 4, kind: output, shape index: {1}]
  %5 = xla_tuple %s3, %s4
  %s6 = sld [smem:[#allocation0]]
  $region30: #{_forward_impl.1} parent=0
    _
  %s8 = ssub.s32 1, %s6
  %s9 = scalar_select 0, %s8, %s6
  // Predicated region
  $region2: #{_forward_impl.1} parent=0 // pred_check
    _
  $region3: #{_forward_impl.1} parent=0 // pred_check_branch
    %11 = sbr.rel (0) target = $region5
  $region4: #{_forward_impl.1} parent=0 // pred_region
    _
  $region5: #{_forward_impl.1} parent=0 // pred_fallthru
    _
  // Predicated region
  $region6: #{_forward_impl.1} parent=0 // pred_check
    _
  $region7: #{_forward_impl.1} parent=0 // pred_check_branch
    %13 = sbr.rel (0) target = $region9
  $region8: #{_forward_impl.1} parent=0 // pred_region
    _
  $region9: #{_forward_impl.1} parent=0 // pred_fallthru
    _
  // Predicated region
  $region10: #{_forward_impl.1} parent=0 // pred_check
    _
  $region11: #{_forward_impl.1} parent=0 // pred_check_branch
    %15 = sbr.rel (0) target = $region13
  $region12: #{_forward_impl.1} parent=0 // pred_region
    _
  $region13: #{_forward_impl.1} parent=0 // pred_fallthru
    _
  %v16 = vld [vmem:[%s0] sm:$0xff]
  %v17 = vld [vmem:[%s0 + $0x8] sm:$0xff]
  %v18 = vld [vmem:[%s0 + $0x10] sm:$0xff]
  %v19 = vadd.f32 %v16, 3.1415927
  %v20 = vadd.f32 %v17, 3.1415927
  %v21 = vadd.f32 %v18, 3.1415927
  %v22 = vmul.f32 %v19, 0.15915494
  %v23 = vmul.f32 %v20, 0.15915494
  %v24 = vmul.f32 %v21, 0.15915494
  %v25 = vfloor.f32 %v22
  %v26 = vfloor.f32 %v23
  %v27 = vfloor.f32 %v24
  %v28 = vmul.f32 %v25, 6.2831855
  %v29 = vmul.f32 %v26, 6.2831855
  %v30 = vmul.f32 %v27, 6.2831855
  %v31 = vsub.f32 %v19, %v28
  %v32 = vsub.f32 %v20, %v29
  %v33 = vsub.f32 %v21, %v30
  %v34 = vsub.f32 %v31, 3.1415927
  %v35 = vsub.f32 %v32, 3.1415927
  %v36 = vsub.f32 %v33, 3.1415927
  %v37 = vand.u32 2147483647, %v34
  %v38 = vand.u32 2147483647, %v35
  %v39 = vand.u32 2147483647, %v36
  %v40 = vld [vmem:[%s1] sm:$0x7]
  %v42 = vlaneseq
  %v43 = vshrl.u32 %v42, 7
  %v44 = vsub.s32 0, %v43
  %v45 = vrot.slane %v40, %v44
  %v46 = vlaneseq
  %v47 = vshrl.u32 %v46, 7
  %v48 = vsub.s32 1, %v47
  %v49 = vrot.slane %v40, %v48
  %v50 = vlaneseq
  %v51 = vshrl.u32 %v50, 7
  %v52 = vsub.s32 2, %v51
  %v53 = vrot.slane %v40, %v52
  %v57 = vmul.f32 %v37, %v45
  %v58 = vmul.f32 %v38, %v49
  %v59 = vmul.f32 %v39, %v53
  %v60 = vand.u32 2147483647, %v57
  %v61 = vand.u32 2147483647, %v58
  %v62 = vand.u32 2147483647, %v59
  %v63 = vmul.f32 %v60, %v60
  %v64 = vmul.f32 %v61, %v61
  %v65 = vmul.f32 %v62, %v62
  %v66 = vmul.f32 %v63, 0.0421632
  %v67 = vmul.f32 %v64, 0.0421632
  %v68 = vmul.f32 %v65, 0.0421632
  %v69 = vadd.f32 %v66, 0.024181312
  %v70 = vadd.f32 %v67, 0.024181312
  %v71 = vadd.f32 %v68, 0.024181312
  %v72 = vmul.f32 %v69, %v63
  %v73 = vmul.f32 %v70, %v64
  %v74 = vmul.f32 %v71, %v65
  %v75 = vadd.f32 %v72, 0.045470025
  %v76 = vadd.f32 %v73, 0.045470025
  %v77 = vadd.f32 %v74, 0.045470025
  %v78 = vmul.f32 %v75, %v63
  %v79 = vmul.f32 %v76, %v64
  %v80 = vmul.f32 %v77, %v65
  %v81 = vadd.f32 %v78, 0.074953005
  %v82 = vadd.f32 %v79, 0.074953005
  %v83 = vadd.f32 %v80, 0.074953005
  %v84 = vmul.f32 %v81, %v63
  %v85 = vmul.f32 %v82, %v64
  %v86 = vmul.f32 %v83, %v65
  %v87 = vadd.f32 %v84, 0.16666752
  %v88 = vadd.f32 %v85, 0.16666752
  %v89 = vadd.f32 %v86, 0.16666752
  %v90 = vmul.f32 %v60, %v63
  %v91 = vmul.f32 %v61, %v64
  %v92 = vmul.f32 %v62, %v65
  %v93 = vmul.f32 %v90, %v87
  %v94 = vmul.f32 %v91, %v88
  %v95 = vmul.f32 %v92, %v89
  %v96 = vadd.f32 %v60, %v93
  %v97 = vadd.f32 %v61, %v94
  %v98 = vadd.f32 %v62, %v95
  %vm99 = vcmp.ge.f32.partialorder %v57, 0.0
  %vm100 = vcmp.ge.f32.partialorder %v58, 0.0
  %vm101 = vcmp.ge.f32.partialorder %v59, 0.0
  %v102 = vsub.f32 0.0, %v96
  %v103 = vsub.f32 0.0, %v97
  %v104 = vsub.f32 0.0, %v98
  %v105 = vsel %vm99, %v96, %v102
  %v106 = vsel %vm100, %v97, %v103
  %v107 = vsel %vm101, %v98, %v104
  %v108 = vsub.f32 1.5707964, %v105
  %v109 = vsub.f32 1.5707964, %v106
  %v110 = vsub.f32 1.5707964, %v107
  %v111 = vsub.f32 1.0, %v60
  %v112 = vsub.f32 1.0, %v61
  %v113 = vsub.f32 1.0, %v62
  %v114 = vmul.f32 %v111, 0.5
  %v115 = vmul.f32 %v112, 0.5
  %v116 = vmul.f32 %v113, 0.5
  %v117 = vrsqrt.pop %v114
  %v118 = vmul.f32 %v114, %v117
  %vm119 = vcmp.eq.f32.partialorder %v114, inf
  %v120 = vsel %vm119, %v114, %v118
  %vm121 = vcmp.eq.f32.partialorder %v114, 0.0
  %v122 = vand.u32 %v114, 2147483648
  %v123 = vsel %vm121, %v122, %v120
  %v124 = vrsqrt.pop %v115
  %v125 = vmul.f32 %v115, %v124
  %vm126 = vcmp.eq.f32.partialorder %v115, inf
  %v127 = vsel %vm126, %v115, %v125
  %vm128 = vcmp.eq.f32.partialorder %v115, 0.0
  %v129 = vand.u32 %v115, 2147483648
  %v130 = vsel %vm128, %v129, %v127
  %v131 = vrsqrt.pop %v116
  %v132 = vmul.f32 %v116, %v131
  %vm133 = vcmp.eq.f32.partialorder %v116, inf
  %v134 = vsel %vm133, %v116, %v132
  %vm135 = vcmp.eq.f32.partialorder %v116, 0.0
  %v136 = vand.u32 %v116, 2147483648
  %v137 = vsel %vm135, %v136, %v134
  %v138 = vmul.f32 %v123, %v123
  %v139 = vmul.f32 %v130, %v130
  %v140 = vmul.f32 %v137, %v137
  %v141 = vmul.f32 %v138, 0.0421632
  %v142 = vmul.f32 %v139, 0.0421632
  %v143 = vmul.f32 %v140, 0.0421632
  %v144 = vadd.f32 %v141, 0.024181312
  %v145 = vadd.f32 %v142, 0.024181312
  %v146 = vadd.f32 %v143, 0.024181312
  %v147 = vmul.f32 %v144, %v138
  %v148 = vmul.f32 %v145, %v139
  %v149 = vmul.f32 %v146, %v140
  %v150 = vadd.f32 %v147, 0.045470025
  %v151 = vadd.f32 %v148, 0.045470025
  %v152 = vadd.f32 %v149, 0.045470025
  %v153 = vmul.f32 %v150, %v138
  %v154 = vmul.f32 %v151, %v139
  %v155 = vmul.f32 %v152, %v140
  %v156 = vadd.f32 %v153, 0.074953005
  %v157 = vadd.f32 %v154, 0.074953005
  %v158 = vadd.f32 %v155, 0.074953005
  %v159 = vmul.f32 %v156, %v138
  %v160 = vmul.f32 %v157, %v139
  %v161 = vmul.f32 %v158, %v140
  %v162 = vadd.f32 %v159, 0.16666752
  %v163 = vadd.f32 %v160, 0.16666752
  %v164 = vadd.f32 %v161, 0.16666752
  %v165 = vmul.f32 %v123, %v138
  %v166 = vmul.f32 %v130, %v139
  %v167 = vmul.f32 %v137, %v140
  %v168 = vmul.f32 %v165, %v162
  %v169 = vmul.f32 %v166, %v163
  %v170 = vmul.f32 %v167, %v164
  %v171 = vadd.f32 %v123, %v168
  %v172 = vadd.f32 %v130, %v169
  %v173 = vadd.f32 %v137, %v170
  %v174 = vmul.f32 %v171, 2.0
  %v175 = vmul.f32 %v172, 2.0
  %v176 = vmul.f32 %v173, 2.0
  %vm177 = vcmp.gt.f32.partialorder %v57, 0.0
  %vm178 = vcmp.gt.f32.partialorder %v58, 0.0
  %vm179 = vcmp.gt.f32.partialorder %v59, 0.0
  %v180 = vsub.f32 3.1415927, %v174
  %v181 = vsub.f32 3.1415927, %v175
  %v182 = vsub.f32 3.1415927, %v176
  %v183 = vsel %vm177, %v174, %v180
  %v184 = vsel %vm178, %v175, %v181
  %v185 = vsel %vm179, %v176, %v182
  %vm186 = vcmp.le.f32.partialorder %v60, 0.5
  %vm187 = vcmp.le.f32.partialorder %v61, 0.5
  %vm188 = vcmp.le.f32.partialorder %v62, 0.5
  %v189 = vsel %vm186, %v108, %v183
  %v190 = vsel %vm187, %v109, %v184
  %v191 = vsel %vm188, %v110, %v185
  %v192 = vld [vmem:[%s2] sm:$0x7]
  %v194 = vlaneseq
  %v195 = vshrl.u32 %v194, 7
  %v196 = vsub.s32 0, %v195
  %v197 = vrot.slane %v192, %v196
  %v198 = vlaneseq
  %v199 = vshrl.u32 %v198, 7
  %v200 = vsub.s32 1, %v199
  %v201 = vrot.slane %v192, %v200
  %v202 = vlaneseq
  %v203 = vshrl.u32 %v202, 7
  %v204 = vsub.s32 2, %v203
  %v205 = vrot.slane %v192, %v204
  %v209 = vsub.f32 %v189, %v197
  %v210 = vsub.f32 %v190, %v201
  %v211 = vsub.f32 %v191, %v205
  %212 = vst [vmem:[%s3] sm:$0xff] %v209
  %213 = vst [vmem:[%s3 + $0x8] sm:$0xff] %v210
  %214 = vst [vmem:[%s3 + $0x10] sm:$0xff] %v211
  %vm215 = vcmp.ne.f32.partialorder %v209, %v209
  %vm216 = vcmp.ne.f32.partialorder %v210, %v210
  %vm217 = vcmp.ne.f32.partialorder %v211, %v211
  %v218 = vsel %vm215, 1.0, 0.0
  %v219 = vsel %vm216, 1.0, 0.0
  %v220 = vsel %vm217, 1.0, 0.0
  %v221 = vmax.f32 %v218, %v219
  %v222 = vmax.f32 %v221, %v220
  %223 = vmax.xlane.f32.xlu0 %v222
  %v224 = vpop.xlane.xlu0 %223
  %v225 = vrot.slane %v224, 4
  %v226 = vmax.f32 %v224, %v225
  %v227 = vrot.slane %v226, 2
  %v228 = vmax.f32 %v226, %v227
  %v229 = vrot.slane %v228, 1
  %v230 = vmax.f32 %v228, %v229
  %s231 = vtos %v230
  %p232 = scmp.gt.f32.partialorder %s231, 0.0
  %s233 = scalar_select %p232, 1, 0
  %v234 = vstv %s233
  %235 = vst [vmem:[%s4] sm:$0xff] %v234
  // Predicated region
  $region14: #{_forward_impl.1} parent=0 // pred_check
    _
  $region15: #{_forward_impl.1} parent=0 // pred_check_branch
    %237 = sbr.rel (0) target = $region17
  $region16: #{_forward_impl.1} parent=0 // pred_region
    _
  $region17: #{_forward_impl.1} parent=0 // pred_fallthru
    _
  // Predicated region
  $region18: #{_forward_impl.1} parent=0 // pred_check
    _
  $region19: #{_forward_impl.1} parent=0 // pred_check_branch
    %239 = sbr.rel (0) target = $region21
  $region20: #{_forward_impl.1} parent=0 // pred_region
    _
  $region21: #{_forward_impl.1} parent=0 // pred_fallthru
    _
  // Predicated region
  $region22: #{_forward_impl.1} parent=0 // pred_check
    _
  $region23: #{_forward_impl.1} parent=0 // pred_check_branch
    %241 = sbr.rel (0) target = $region25
  $region24: #{_forward_impl.1} parent=0 // pred_region
    _
  $region25: #{_forward_impl.1} parent=0 // pred_fallthru
    _
  // Predicated region
  $region26: #{_forward_impl.1} parent=0 // pred_check
    _
  $region27: #{_forward_impl.1} parent=0 // pred_check_branch
    %243 = sbr.rel (0) target = $region29
  $region28: #{_forward_impl.1} parent=0 // pred_region
    _
  $region29: #{_forward_impl.1} parent=0 // pred_fallthru
    _

</llo_original>
